<compile_context>
chip_gen: v5e
topology: v5e:2x2
jax: 0.10.0
libtpu: 0.0.40
codegen_flags: <defaults>
</compile_context>

<pallas_src>
import jax
import jax.numpy as jnp
from jax.experimental import pallas as pl
from jax.experimental.pallas import tpu as pltpu

PARAM_ROWS = 100
PARAM_COLS = 1
PARAM_SIZE = PARAM_ROWS * PARAM_COLS  # 100
PADDED_LANES = 128                    # one full lane-dense vreg row


def _abs_sum_kernel(param_ref, sum_ref):
    # param_ref: (1, 128) float32 in VMEM — lane-dense, zero-padded past the
    #            100 live elements, so the load and reduce are unmasked.
    # sum_ref:   (1, 1) float32 in SMEM.
    sum_ref[0, 0] = jnp.abs(jnp.sum(param_ref[...]))


def make_lane_dense_param(param):
    """One-time, init-time relayout: (100, 1) -> zero-padded (1, 128).

    Row-major flattening preserves element order, so the reduction over the
    padded tile equals the reduction over the original parameter.
    """
    flat = param.reshape(PARAM_SIZE)
    return jnp.zeros((1, PADDED_LANES), dtype=jnp.float32).at[0, :PARAM_SIZE].set(flat)


@jax.jit
def simple_model_forward(x, param, param_lane):
    """Mirrors SimpleModel.forward in eval mode.

    Args:
      x: ignored (matches the PyTorch module, which discards its input).
      param: (100, 1) float32 parameter (returned directly as 'preds').
      param_lane: (1, 128) float32 lane-dense, zero-padded copy of `param`,
        built once at init time by make_lane_dense_param.

    Returns:
      ({'preds': (100, 1) array}, scalar abs-sum)
    """
    del x  # forward discards the input, exactly like the PyTorch module
    # TODO(synk): training-mode `param + rand_like(param) * 0.01` branch not
    # implemented (module is exercised in eval mode here); if ever needed,
    # use pltpu.prng_seed / pltpu.prng_random_bits inside a kernel.

    abs_sum = pl.pallas_call(
        _abs_sum_kernel,
        out_shape=jax.ShapeDtypeStruct((1, 1), jnp.float32),
        in_specs=[
            # Block == full array shape (1, 128): a single unmasked vreg row.
            pl.BlockSpec((1, PADDED_LANES), lambda: (0, 0)),
        ],
        out_specs=pl.BlockSpec(memory_space=pltpu.MemorySpace.SMEM),
        cost_estimate=pl.CostEstimate(
            flops=PADDED_LANES,
            transcendentals=0,
            bytes_accessed=PADDED_LANES * 4 + 4,
        ),
    )(param_lane)

    # preds == param (arrays are immutable); scalar extraction fuses inside
    # this jit instead of becoming a standalone slice launch.
    return ({"preds": param}, abs_sum[0, 0])


if __name__ == "__main__":
    key = jax.random.PRNGKey(0)
    # Small example input consistent with "forward takes an arbitrary tensor".
    x = jax.random.normal(key, (2, 4, 16, 16), dtype=jnp.float32)

    # Deterministic parameter init, matching nn.Parameter(torch.ones(100, 1)).
    param = jnp.ones((PARAM_ROWS, PARAM_COLS), dtype=jnp.float32)
    # One-time lane-dense relayout (init-time, not per-call).
    param_lane = make_lane_dense_param(param)

    (out_dict, abs_sum) = simple_model_forward(x, param, param_lane)
    jax.block_until_ready((out_dict["preds"], abs_sum))

    # Sanity checks against the reference semantics.
    assert out_dict["preds"].shape == (PARAM_ROWS, PARAM_COLS)
    assert out_dict["preds"].dtype == jnp.float32
    assert bool(jnp.allclose(out_dict["preds"], param))
    assert bool(jnp.allclose(abs_sum, jnp.abs(jnp.sum(param))))  # == 100.0

    print("KERNEL_OK")
</pallas_src>

<mosaic_0001>
module attributes {stable_mosaic.version = 11 : i64} {
  func.func @_abs_sum_kernel(%arg0: memref<1x128xf32, #tpu.memory_space<vmem>>, %arg1: memref<1x1xf32, #tpu.memory_space<smem>>) attributes {dimension_semantics = [], scalar_prefetch = 0 : i64, scratch_operands = 0 : i64, tpu.core_type = #tpu.core_type<tc>} {
    %c0 = arith.constant 0 : index
    %c0_0 = arith.constant 0 : index
    %0 = vector.load %arg0[%c0, %c0_0] : memref<1x128xf32, #tpu.memory_space<vmem>>, vector<1x128xf32>
    %1 = vector.shape_cast %0 : vector<1x128xf32> to vector<1x1x128xf32>
    %cst = arith.constant dense<0.000000e+00> : vector<1xf32>
    %2 = vector.multi_reduction <add>, %1, %cst [1, 2] : vector<1x1x128xf32> to vector<1xf32>
    %3 = vector.shape_cast %2 : vector<1xf32> to vector<1x1x1xf32>
    %4 = vector.extract %3[0, 0, 0] : f32 from vector<1x1x1xf32>
    %5 = math.absf %4 : f32
    %c0_1 = arith.constant 0 : index
    %c0_2 = arith.constant 0 : index
    %6 = memref.load %arg1[%c0_1, %c0_2] : memref<1x1xf32, #tpu.memory_space<smem>>
    memref.store %5, %arg1[%c0_1, %c0_2] : memref<1x1xf32, #tpu.memory_space<smem>>
    return
  }
}

</mosaic_0001>

<llo_original>
// kernel: simple_model_forward.1
$region0: #{simple_model_forward.1}
  #allocation0 [shape = 'u32[]', space=smem, size = 0x4, offset = 0x4, fixed_abs, tag = 'smem constant byte address 0x4 - core index']
  #allocation1 [shape = 'u32[72,128]{1,0:T(1,128)}', space=vmem, size = 0x9000, scoped, tag = 'internal scratch']
  %s0 = inlined_call_operand.hbm [shape: f32[1,128], index: 0, kind: input, shape index: {}]
  %s1 = inlined_call_operand.hbm [shape: f32[1,1], index: 1, kind: output, shape index: {}]
  %s2 = sld [smem:[#allocation0]]
  $region18: #{simple_model_forward.1} parent=0
    _
  %s4 = ssub.s32 1, %s2
  %s5 = scalar_select 0, %s4, %s2
  $region1: #{simple_model_forward.1} parent=0
    #allocation2 [shape = 'u8[512]{0}', space=vmem, size = 0x400, scoped, tag = 'input window, operand 0, single buffered']
    #allocation3 [shape = 's32[1]{0}', space=sflag, size = 0x4, scoped, tag = 'scoped memory for simple_model_forward.1']
    #allocation4 [shape = 's32[1]{0}', space=sflag, size = 0x4, scoped, tag = 'scoped memory for simple_model_forward.1']
    #allocation5 [shape = 'u8[512]{0}', space=smem, size = 0x200, scoped, tag = 'output window, operand 0, single buffered']
    %6 = vsyncpa [#allocation3], 0
    %7 = vsyncpa [#allocation4], 0
    // Predicated region
    $region2: #{simple_model_forward.1} parent=1 // pred_check
      _
    $region3: #{simple_model_forward.1} parent=1 // pred_check_branch
      %9 = sbr.rel (0) target = $region5
    $region4: #{simple_model_forward.1} parent=1 // pred_region
      %11 = vsyncadd [#allocation3], 0
      %s13 = sshll.u32 %s0, 4
      %s14 = int_to_ptr.hbm [resolvable:$true] %s13
      %s15 = sshll.u32 [#allocation2], 4
      %s16 = int_to_ptr.vmem [resolvable:$true] %s15
      %18 = dma.hbm_to_vmem [thread:$0]  %s14, 16, %s16, [#allocation3]
    $region5: #{simple_model_forward.1} parent=1 // pred_fallthru
      _
    // Predicated region
    $region6: #{simple_model_forward.1} parent=1 // pred_check
      _
    $region7: #{simple_model_forward.1} parent=1 // pred_check_branch
      %20 = sbr.rel (0) target = $region9
    $region8: #{simple_model_forward.1} parent=1 // pred_region
      %22 = dma.done [#allocation3], 16
    $region9: #{simple_model_forward.1} parent=1 // pred_fallthru
      _
    %v23 = vld [vmem:[#allocation2] sm:$0x1]
    %vm24 = vcmask 1040384
    %v25 = vsel %vm24, %v23, 0.0
    %26 = vadd.xlane.f32.xlu0 %v25
    %v27 = vpop.xlane.xlu0 %26
    %v28 = vrot.slane %v27, 4
    %v29 = vadd.f32 %v27, %v28
    %v30 = vrot.slane %v29, 2
    %v31 = vadd.f32 %v29, %v30
    %v32 = vrot.slane %v31, 1
    %v33 = vadd.f32 %v31, %v32
    %s34 = vtos %v33
    %s35 = sand.u32 2147483647, %s34
    %s36 = scalar_lea.smem [#allocation5], 0
    %37 = sst [smem:[%s36]] %s35
    // Predicated region
    $region10: #{simple_model_forward.1} parent=1 // pred_check
      _
    $region11: #{simple_model_forward.1} parent=1 // pred_check_branch
      %39 = sbr.rel (0) target = $region13
    $region12: #{simple_model_forward.1} parent=1 // pred_region
      %41 = vsyncadd [#allocation4], 0
      %s43 = sshll.u32 %s1, 4
      %s44 = int_to_ptr.hbm [resolvable:$true] %s43
      %46 = dma.smem_to_hbm [#allocation5], 16, %s44, [#allocation4]
    $region13: #{simple_model_forward.1} parent=1 // pred_fallthru
      _
    // Predicated region
    $region14: #{simple_model_forward.1} parent=1 // pred_check
      _
    $region15: #{simple_model_forward.1} parent=1 // pred_check_branch
      %48 = sbr.rel (0) target = $region17
    $region16: #{simple_model_forward.1} parent=1 // pred_region
      %50 = dma.done [#allocation4], 16
    $region17: #{simple_model_forward.1} parent=1 // pred_fallthru
      _
    %51 = sfence
    %52 = vsyncpa [#allocation3], 1
    %53 = vsyncpa [#allocation4], 1

</llo_original>
